<compile_context>
chip_gen: v7x
topology: tpu7x:2x2x1
jax: 0.10.0
libtpu: 0.0.40
codegen_flags: <defaults>
</compile_context>

<pallas_src>
import jax
import jax.numpy as jnp
from jax.experimental import pallas as pl
from jax.experimental.pallas import tpu as pltpu


# ----------------------------- kernels ---------------------------------------


def _linear_tanh_kernel(x_ref, w_ref, b_ref, o_ref):
    # y = tanh(x @ W + b)     x:(TB,F)  W:(F,PP)  b:(1,PP)  -> o:(TB,PP)
    y = jnp.dot(x_ref[...], w_ref[...], preferred_element_type=jnp.float32)
    y = y + b_ref[...]
    o_ref[...] = jnp.tanh(y).astype(o_ref.dtype)


def _ln_fold_linear_tanh_kernel(x_ref, wg_ref, c_ref, b_ref, o_ref,
                                acc_ref, mean_ref, m2_ref):
    # LayerNorm(eps=1e-6) folded into the weight (prepare step):
    #   Wg = diag(gamma) @ W.T,  c = colsum(Wg),  b' = beta @ W.T + b
    #   y  = tanh( rstd * (x @ Wg - mean * c) + b' )
    # Grid: (batch tiles [parallel], K tiles [arbitrary, innermost]).
    k = pl.program_id(1)
    nk = pl.num_programs(1)

    @pl.when(k == 0)
    def _():
        acc_ref[...] = jnp.zeros_like(acc_ref)
        mean_ref[...] = jnp.zeros_like(mean_ref)
        m2_ref[...] = jnp.zeros_like(m2_ref)

    x = x_ref[...]
    tk = x.shape[-1]
    xf = x.astype(jnp.float32)

    # Chunked Welford/Chan merge (robust vs. the E[x^2]-mean^2 single pass).
    cm = jnp.sum(xf, axis=-1, keepdims=True) * (1.0 / tk)          # chunk mean (TB,1)
    cm2 = jnp.sum(jnp.square(xf - cm), axis=-1, keepdims=True)     # chunk M2   (TB,1)
    n_a = (k * tk).astype(jnp.float32)                             # elements so far
    n_b = float(tk)
    n = n_a + n_b
    delta = cm - mean_ref[...]
    mean_ref[...] = mean_ref[...] + delta * (n_b / n)
    m2_ref[...] = m2_ref[...] + cm2 + jnp.square(delta) * (n_a * n_b / n)

    # Streaming matmul against the gamma-folded weight; operands keep their input /
    # compute dtype (bf16 stays bf16), f32 MXU accumulation.
    acc_ref[...] += jnp.dot(x, wg_ref[...], preferred_element_type=jnp.float32)

    @pl.when(k == nk - 1)
    def _():
        mean = mean_ref[...]
        var = m2_ref[...] * (1.0 / n)                              # n == F on last step
        rstd = jax.lax.rsqrt(var + 1e-6)
        y = rstd * (acc_ref[...] - mean * c_ref[...]) + b_ref[...]
        o_ref[...] = jnp.tanh(y).astype(o_ref.dtype)


# ----------------------------- planning helpers -------------------------------


def _round_up(n, m):
    return ((n + m - 1) // m) * m


def _cdiv(a, b):
    return (a + b - 1) // b


def _vmem_capacity_bytes():
    """Generation-aware VMEM capacity; conservative (v7x per-TC) fallback."""
    try:
        cap = int(pltpu.get_tpu_info().vmem_capacity_bytes)
        if cap > 0:
            return cap
    except Exception:
        pass
    return 64 * 1024 * 1024


def _single_buffered(block_shape, index_map):
    """Constant-index_map operand: the 2nd pipeline buffer is dead weight."""
    try:
        return pl.BlockSpec(block_shape, index_map, pipeline_mode=pl.Buffered(1))
    except Exception:  # older jax without pipeline_mode: plain (double-buffered) spec
        return pl.BlockSpec(block_shape, index_map)


def _plan_tiles(batch, feat, pp, x_isz, w_isz, out_isz, *, k_tileable, k_tile=None):
    """Pick (tb, tk) tiles and the scoped-VMEM limit from the actual live buffers."""
    sub = 8 * max(1, 4 // max(1, x_isz))          # sublane packing: 8 f32 / 16 bf16 / 32 i8
    cap = _vmem_capacity_bytes()
    budget = cap // 2                             # working-set budget, leaves headroom

    # ---- K (feature) tile: stream the weight only when it won't sit in VMEM -----
    if k_tile is not None and feat % int(k_tile) == 0:
        tk = int(k_tile)
    elif (not k_tileable) or feat * pp * w_isz <= budget // 3 or feat % 128 != 0:
        tk = feat                                 # weight stays VMEM-resident
    else:
        per128 = 2 * 128 * pp * w_isz             # double-buffered streamed weight block
        max_mult = max(1, (budget // 3) // per128)
        tk = 128
        for m in range(min(max_mult, feat // 128), 0, -1):
            if feat % (128 * m) == 0:
                tk = 128 * m
                break
    nk = feat // tk
    w_vmem = (1 if nk == 1 else 2) * tk * pp * w_isz

    # ---- batch tile --------------------------------------------------------------
    per_row = 2 * tk * x_isz + 2 * pp * out_isz + pp * 4 + 8      # x + out + acc + stats
    if batch <= sub:
        tb = batch                                # full-extent block (no partial rows)
    else:
        tb = max(sub, (budget - w_vmem) // per_row)
        if batch > 2 * sub:
            tb = min(tb, _round_up(_cdiv(batch, 4), sub))         # >= ~4 grid steps
        else:
            tb = min(tb, _round_up(_cdiv(batch, 2), sub))         # >= 2 grid steps
        tb = max(sub, (tb // sub) * sub)
        tb = min(tb, 512)
        tb = min(tb, _round_up(batch, sub))
    nb = _cdiv(batch, tb)

    # ---- scoped VMEM limit from the actual live buffers ---------------------------
    need = (2 * tb * tk * x_isz                   # x, double-buffered
            + w_vmem                              # weight (1 buf resident / 2 streamed)
            + 2 * pp * 4                          # c + folded bias (f32, single buffer)
            + 2 * tb * pp * out_isz               # out, double-buffered
            + tb * pp * 4 + 2 * tb * 4)           # f32 accumulator + mean/M2 scratch
    vmem_limit = int(min(cap * 9 // 10, max(need * 3 // 2 + (8 << 20), 32 << 20)))
    return tb, tk, nb, nk, vmem_limit


# ----------------------------- params: init / prepare -------------------------


def init_point_pred_head_params(key, in_features, num_points, std, arch):
    """Deterministic param init matching PointPredHead.init_param() (torch layout)."""
    p = num_points // 4
    (w_key,) = jax.random.split(key, 1)
    params = {
        'weight': std * jax.random.normal(w_key, (p, in_features), jnp.float32),
        'bias': jnp.zeros((p,), jnp.float32),
    }
    if 'convnext' in arch:
        params['ln_gamma'] = jnp.ones((in_features,), jnp.float32)
        params['ln_beta'] = jnp.zeros((in_features,), jnp.float32)
    return params


def prepare_point_pred_head_params(params, arch, compute_dtype=None):
    """One-time prep: transpose W, pad output lanes to 128, fold LN affine into W.

    compute_dtype should match the activation dtype (e.g. bf16) so the MXU sees
    same-dtype operands; defaults to the parameter dtype.
    """
    w = params['weight']                              # (P, F) torch layout
    p, feat = w.shape
    pp = _round_up(max(p, 1), 128)
    if compute_dtype is None:
        compute_dtype = w.dtype
    wf = w.astype(jnp.float32)
    bias = params['bias'].astype(jnp.float32)
    prepared = {'num_out': p, 'in_features': feat}

    if 'convnext' in arch:
        g = params['ln_gamma'].astype(jnp.float32)
        beta = params['ln_beta'].astype(jnp.float32)
        wg = (wf * g[None, :]).T                      # (F, P): diag(gamma) @ W.T
        c = jnp.sum(wg, axis=0)                       # (P,):   gamma @ W.T
        b_fold = beta @ wf.T + bias                   # (P,):   beta @ W.T + b
        prepared['w_kernel'] = (jnp.zeros((feat, pp), compute_dtype)
                                .at[:, :p].set(wg.astype(compute_dtype)))
        prepared['c_kernel'] = jnp.zeros((1, pp), jnp.float32).at[:, :p].set(c)
        prepared['b_kernel'] = jnp.zeros((1, pp), jnp.float32).at[:, :p].set(b_fold)
    elif 'resnet' in arch:
        prepared['w_kernel'] = (jnp.zeros((feat, pp), compute_dtype)
                                .at[:, :p].set(wf.T.astype(compute_dtype)))
        prepared['b_kernel'] = jnp.zeros((1, pp), jnp.float32).at[:, :p].set(bias)
    else:
        raise NotImplementedError(arch)
    return prepared


# ----------------------------- forward ----------------------------------------


def point_pred_head_forward(x, prepared, arch, *, k_tile=None):
    """Pallas forward of PointPredHead (eval mode).

    x        : (batch, in_features) for 'resnet', or (batch, C, H, W) for 'convnext'.
    prepared : output of prepare_point_pred_head_params().
    k_tile   : optional explicit feature-tile override (convnext path, must divide F).
    """
    if 'convnext' in arch:
        x2d = x.reshape(x.shape[0], -1)               # nn.Flatten(1) — glue
        is_convnext = True
    elif 'resnet' in arch:
        x2d = x
        is_convnext = False
    else:
        raise NotImplementedError(arch)

    batch, feat = x2d.shape
    assert feat == prepared['in_features']
    w = prepared['w_kernel']                          # (F, PP)
    b = prepared['b_kernel']                          # (1, PP) f32
    pp = w.shape[1]
    p = prepared['num_out']

    x_isz = jnp.dtype(x2d.dtype).itemsize
    w_isz = jnp.dtype(w.dtype).itemsize
    out_isz = x_isz

    tb, tk, nb, nk, vmem_limit = _plan_tiles(
        batch, feat, pp, x_isz, w_isz, out_isz,
        k_tileable=is_convnext, k_tile=(k_tile if is_convnext else None))

    cost = pl.CostEstimate(
        flops=2 * batch * feat * pp,
        transcendentals=batch * pp,
        bytes_accessed=batch * feat * x_isz + feat * pp * w_isz + batch * pp * out_isz)

    out_shape = jax.ShapeDtypeStruct((batch, pp), x2d.dtype)

    if is_convnext:
        c = prepared['c_kernel']
        grid = (nb, nk)
        x_spec = pl.BlockSpec((tb, tk), lambda i, k: (i, k))
        if nk == 1:                                   # resident weight: single buffer
            wg_spec = _single_buffered((tk, pp), lambda i, k: (0, 0))
        else:                                         # streamed weight: double buffer
            wg_spec = pl.BlockSpec((tk, pp), lambda i, k: (k, 0))
        c_spec = _single_buffered((1, pp), lambda i, k: (0, 0))
        b_spec = _single_buffered((1, pp), lambda i, k: (0, 0))
        o_spec = pl.BlockSpec((tb, pp), lambda i, k: (i, 0))
        y = pl.pallas_call(
            _ln_fold_linear_tanh_kernel,
            out_shape=out_shape,
            grid=grid,
            in_specs=[x_spec, wg_spec, c_spec, b_spec],
            out_specs=o_spec,
            scratch_shapes=[pltpu.VMEM((tb, pp), jnp.float32),   # acc
                            pltpu.VMEM((tb, 1), jnp.float32),    # running mean
                            pltpu.VMEM((tb, 1), jnp.float32)],   # running M2
            compiler_params=pltpu.CompilerParams(
                dimension_semantics=("parallel", "arbitrary"),
                vmem_limit_bytes=vmem_limit),
            cost_estimate=cost,
        )(x2d, w, c, b)
    else:
        grid = (nb,)
        x_spec = pl.BlockSpec((tb, feat), lambda i: (i, 0))
        w_spec = _single_buffered((feat, pp), lambda i: (0, 0))
        b_spec = _single_buffered((1, pp), lambda i: (0, 0))
        o_spec = pl.BlockSpec((tb, pp), lambda i: (i, 0))
        y = pl.pallas_call(
            _linear_tanh_kernel,
            out_shape=out_shape,
            grid=grid,
            in_specs=[x_spec, w_spec, b_spec],
            out_specs=o_spec,
            compiler_params=pltpu.CompilerParams(
                dimension_semantics=("parallel",),
                vmem_limit_bytes=vmem_limit),
            cost_estimate=cost,
        )(x2d, w, b)

    return y[:, :p]                                   # drop output-lane padding


# ----------------------------- reference + main -------------------------------


def _ref_forward(x, params, arch):
    if 'convnext' in arch:
        x = x.reshape(x.shape[0], -1)
        mean = jnp.mean(x, axis=-1, keepdims=True)
        var = jnp.mean(jnp.square(x - mean), axis=-1, keepdims=True)
        x = (x - mean) * jax.lax.rsqrt(var + 1e-6)
        x = x * params['ln_gamma'] + params['ln_beta']
    return jnp.tanh(x @ params['weight'].T + params['bias'])


if __name__ == "__main__":
    key = jax.random.PRNGKey(0)
    keys = jax.random.split(key, 8)

    num_points = 16          # -> 4 output columns
    std = 0.01

    # ---- resnet arch: pooled (batch, in_features) activations ----
    in_features = 128
    batch = 2
    x_r = jax.random.normal(keys[0], (batch, in_features), jnp.float32)
    params_r = init_point_pred_head_params(keys[1], in_features, num_points, std, 'resnet50')
    params_r['bias'] = 0.05 * jax.random.normal(keys[2], (num_points // 4,), jnp.float32)
    prep_r = prepare_point_pred_head_params(params_r, 'resnet50')
    y_r = jax.block_until_ready(point_pred_head_forward(x_r, prep_r, 'resnet50'))
    ref_r = _ref_forward(x_r, params_r, 'resnet50')
    assert y_r.shape == (batch, num_points // 4)
    assert jnp.allclose(y_r, ref_r, atol=1e-5)

    # ---- convnext arch: (batch, C, H, W) feature map, Flatten(1) -> (batch, 256) ----
    # batch=10 exercises the partial (masked-writeback) batch block; non-trivial
    # gamma/beta/bias exercise the folded-LN math.
    c_feat, h, wsp = 16, 4, 4
    in_features_c = c_feat * h * wsp      # 256
    batch_c = 10
    x_c = jax.random.normal(keys[3], (batch_c, c_feat, h, wsp), jnp.float32)
    params_c = init_point_pred_head_params(keys[4], in_features_c, num_points, std,
                                           'convnext_tiny')
    params_c['ln_gamma'] = 1.0 + 0.1 * jax.random.normal(keys[5], (in_features_c,), jnp.float32)
    params_c['ln_beta'] = 0.1 * jax.random.normal(keys[6], (in_features_c,), jnp.float32)
    params_c['bias'] = 0.05 * jax.random.normal(keys[7], (num_points // 4,), jnp.float32)
    prep_c = prepare_point_pred_head_params(params_c, 'convnext_tiny')
    ref_c = _ref_forward(x_c, params_c, 'convnext_tiny')

    # resident-weight path (nk = 1)
    y_c = jax.block_until_ready(point_pred_head_forward(x_c, prep_c, 'convnext_tiny'))
    assert y_c.shape == (batch_c, num_points // 4)
    assert jnp.allclose(y_c, ref_c, atol=1e-5)

    # streamed-weight / Welford-merge K path (nk = 2) must match too
    y_c2 = jax.block_until_ready(
        point_pred_head_forward(x_c, prep_c, 'convnext_tiny', k_tile=128))
    assert jnp.allclose(y_c2, ref_c, atol=1e-5)

    print("KERNEL_OK")
</pallas_src>

<mosaic_0001>
module attributes {stable_mosaic.version = 11 : i64} {
  func.func @_linear_tanh_kernel(%arg0: i32, %arg1: memref<2x128xf32, #tpu.memory_space<vmem>>, %arg2: memref<128x128xf32, #tpu.memory_space<vmem>>, %arg3: memref<1x128xf32, #tpu.memory_space<vmem>>, %arg4: memref<2x128xf32, #tpu.memory_space<vmem>>) attributes {dimension_semantics = [#tpu.dimension_semantics<parallel>], iteration_bounds = array<i64: 1>, scalar_prefetch = 0 : i64, scratch_operands = 0 : i64, tpu.core_type = #tpu.core_type<tc>, window_params = [{transform_indices = @transform_0, window_bounds = array<i64: 2, 128>}, {pipeline_mode = #tpu.pipeline_mode<synchronous>, transform_indices = @transform_1, window_bounds = array<i64: 128, 128>}, {pipeline_mode = #tpu.pipeline_mode<synchronous>, transform_indices = @transform_2, window_bounds = array<i64: 1, 128>}, {transform_indices = @transform_3, window_bounds = array<i64: 2, 128>}]} {
    %c0 = arith.constant 0 : index
    %c0_0 = arith.constant 0 : index
    %0 = vector.load %arg1[%c0, %c0_0] : memref<2x128xf32, #tpu.memory_space<vmem>>, vector<2x128xf32>
    %c0_1 = arith.constant 0 : index
    %c0_2 = arith.constant 0 : index
    %1 = vector.load %arg2[%c0_1, %c0_2] : memref<128x128xf32, #tpu.memory_space<vmem>>, vector<128x128xf32>
    %cst = arith.constant dense<0.000000e+00> : vector<2x128xf32>
    %2 = tpu.matmul %0, %1, %cst {dimension_numbers = #tpu.dot_dimension_numbers<[1], [0], [0], [1], [0, 0, 1, 1], [], []>} : vector<2x128xf32>, vector<128x128xf32>, vector<2x128xf32> -> vector<2x128xf32>
    %c0_3 = arith.constant 0 : index
    %c0_4 = arith.constant 0 : index
    %3 = vector.load %arg3[%c0_3, %c0_4] : memref<1x128xf32, #tpu.memory_space<vmem>>, vector<1x128xf32>
    %4 = vector.broadcast %3 : vector<1x128xf32> to vector<2x128xf32>
    %5 = arith.addf %2, %4 : vector<2x128xf32>
    %6 = math.tanh %5 : vector<2x128xf32>
    %c0_5 = arith.constant 0 : index
    %c0_6 = arith.constant 0 : index
    %7 = vector.load %arg4[%c0_5, %c0_6] : memref<2x128xf32, #tpu.memory_space<vmem>>, vector<2x128xf32>
    tpu.vector_store %arg4[%c0_5, %c0_6], %6 {strides = array<i32>} : memref<2x128xf32, #tpu.memory_space<vmem>>, vector<2x128xf32>,
    return
  }
  func.func @transform_0(%arg0: i32) -> (i32, i32) {
    %c0_i32 = arith.constant 0 : i32
    %c0_i32_0 = arith.constant 0 : i32
    return %arg0, %c0_i32 : i32, i32
  }
  func.func @transform_1(%arg0: i32) -> (i32, i32) {
    %c0_i32 = arith.constant 0 : i32
    %c0_i32_0 = arith.constant 0 : i32
    %c0_i32_1 = arith.constant 0 : i32
    return %c0_i32, %c0_i32_0 : i32, i32
  }
  func.func @transform_2(%arg0: i32) -> (i32, i32) {
    %c0_i32 = arith.constant 0 : i32
    %c0_i32_0 = arith.constant 0 : i32
    %c0_i32_1 = arith.constant 0 : i32
    return %c0_i32, %c0_i32_0 : i32, i32
  }
  func.func @transform_3(%arg0: i32) -> (i32, i32) {
    %c0_i32 = arith.constant 0 : i32
    %c0_i32_0 = arith.constant 0 : i32
    return %arg0, %c0_i32 : i32, i32
  }
}

</mosaic_0001>

<llo_original>
// kernel: tpu_custom_call.1
$region0: #{tpu_custom_call.1}
  #allocation0 [shape = 'u32[]', space=smem, size = 0x4, offset = 0x4, fixed_abs, tag = 'smem constant byte address 0x4 - core index']
  #allocation1 [shape = 'u32[144,128]{1,0:T(1,128)}', space=vmem, size = 0x12000, scoped, tag = 'internal scratch']
  %s0 = inlined_call_operand.hbm [shape: f32[2,128], index: 0, kind: input, shape index: {}]
  %s1 = inlined_call_operand.hbm [shape: f32[128,128], index: 1, kind: input, shape index: {}]
  %s2 = inlined_call_operand.vmem [shape: f32[1,128], index: 2, kind: input, shape index: {}]
  %s3 = inlined_call_operand.hbm [shape: f32[2,128], index: 3, kind: output, shape index: {}]
  %s4 = sld [smem:[#allocation0]]
  $region30: #{tpu_custom_call.1} parent=0
    _
  %s6 = ssub.s32 1, %s4
  %s7 = scalar_select 0, %s6, %s4
  $region1: #{tpu_custom_call.1} parent=0
    #allocation2 [shape = 'u8[1024]{0}', space=vmem, size = 0x400, scoped, tag = 'input window, operand 0, single buffered']
    #allocation3 [shape = 's32[1]{0}', space=sflag, size = 0x4, scoped, tag = 'scoped memory for tpu_custom_call.1']
    #allocation4 [shape = 's32[1]{0}', space=sflag, size = 0x4, scoped, tag = 'scoped memory for tpu_custom_call.1']
    #allocation5 [shape = 'u8[65536]{0}', space=vmem, size = 0x10000, scoped, tag = 'input window, operand 1, single buffered']
    #allocation6 [shape = 's32[1]{0}', space=sflag, size = 0x4, scoped, tag = 'scoped memory for tpu_custom_call.1']
    #allocation7 [shape = 'u8[1024]{0}', space=vmem, size = 0x400, scoped, tag = 'output window, operand 0, single buffered']
    %8 = vsyncpa [#allocation3], 0
    %9 = vsyncpa [#allocation6], 0
    %10 = vsyncpa [#allocation4], 0
    // Predicated region
    $region2: #{tpu_custom_call.1} parent=1 // pred_check
      _
    $region3: #{tpu_custom_call.1} parent=1 // pred_check_branch
      %12 = sbr.rel (0) target = $region5
    $region4: #{tpu_custom_call.1} parent=1 // pred_region
      %s14 = ssub.s32 32, 32
      %15 = vsyncadd [#allocation3], %s14
      %s17 = sshll.u32 [#allocation2], 4
      %s18 = int_to_ptr.vmem [resolvable:$true] %s17
      %20 = dma.hbm_to_vmem [thread:$0]  %s0, 32, %s18, [#allocation3]
    $region5: #{tpu_custom_call.1} parent=1 // pred_fallthru
      _
    // Predicated region
    $region6: #{tpu_custom_call.1} parent=1 // pred_check
      _
    $region7: #{tpu_custom_call.1} parent=1 // pred_check_branch
      %22 = sbr.rel (0) target = $region9
    $region8: #{tpu_custom_call.1} parent=1 // pred_region
      %s24 = ssub.s32 2048, 2048
      %25 = vsyncadd [#allocation6], %s24
      %s26 = sshll.u32 [#allocation5], 4
      %s27 = int_to_ptr.vmem [resolvable:$true] %s26
      %32 = dma.hbm_to_vmem [thread:$0]  %s1, 2048, %s27, [#allocation6], 128, 128, 8
    $region9: #{tpu_custom_call.1} parent=1 // pred_fallthru
      _
    // Predicated region
    $region10: #{tpu_custom_call.1} parent=1 // pred_check
      _
    $region11: #{tpu_custom_call.1} parent=1 // pred_check_branch
      %34 = sbr.rel (0) target = $region13
    $region12: #{tpu_custom_call.1} parent=1 // pred_region
      _
    $region13: #{tpu_custom_call.1} parent=1 // pred_fallthru
      _
    // Predicated region
    $region14: #{tpu_custom_call.1} parent=1 // pred_check
      _
    $region15: #{tpu_custom_call.1} parent=1 // pred_check_branch
      %36 = sbr.rel (0) target = $region17
    $region16: #{tpu_custom_call.1} parent=1 // pred_region
      %37 = dma.done [#allocation3], 32
    $region17: #{tpu_custom_call.1} parent=1 // pred_fallthru
      _
    // Predicated region
    $region18: #{tpu_custom_call.1} parent=1 // pred_check
      _
    $region19: #{tpu_custom_call.1} parent=1 // pred_check_branch
      %39 = sbr.rel (0) target = $region21
    $region20: #{tpu_custom_call.1} parent=1 // pred_region
      %40 = dma.done [#allocation6], 2048
    $region21: #{tpu_custom_call.1} parent=1 // pred_fallthru
      _
    %v41 = vld [vmem:[#allocation2] sm:$0x3]
    %v42 = vld [vmem:[#allocation5] sm:$0xff]
    %v43 = vld [vmem:[#allocation5 + $0x8] sm:$0xff]
    %v44 = vld [vmem:[#allocation5 + $0x10] sm:$0xff]
    %v45 = vld [vmem:[#allocation5 + $0x18] sm:$0xff]
    %v46 = vld [vmem:[#allocation5 + $0x20] sm:$0xff]
    %v47 = vld [vmem:[#allocation5 + $0x28] sm:$0xff]
    %v48 = vld [vmem:[#allocation5 + $0x30] sm:$0xff]
    %v49 = vld [vmem:[#allocation5 + $0x38] sm:$0xff]
    %v50 = vld [vmem:[#allocation5 + $0x40] sm:$0xff]
    %v51 = vld [vmem:[#allocation5 + $0x48] sm:$0xff]
    %v52 = vld [vmem:[#allocation5 + $0x50] sm:$0xff]
    %v53 = vld [vmem:[#allocation5 + $0x58] sm:$0xff]
    %v54 = vld [vmem:[#allocation5 + $0x60] sm:$0xff]
    %v55 = vld [vmem:[#allocation5 + $0x68] sm:$0xff]
    %v56 = vld [vmem:[#allocation5 + $0x70] sm:$0xff]
    %v57 = vld [vmem:[#allocation5 + $0x78] sm:$0xff]
    %v58 = vld [vmem:[%s2] sm:$0x1]
    %v60 = vlaneseq
    %v61 = vshrl.u32 %v60, 7
    %v62 = vsub.s32 0, %v61
    %v63 = vrot.slane %v58, %v62
    %65 = vmatprep.subr.mxu0 0.0
    %66 = vmatpush1.msra.mxu0 %v42
    %67 = vmatprep.subr.mxu0 0.0
    %68 = vmatpush1.msra.mxu0 %v43
    %69 = vmatprep.subr.mxu0 0.0
    %70 = vmatpush1.msra.mxu0 %v44
    %71 = vmatprep.subr.mxu0 0.0
    %72 = vmatpush1.msra.mxu0 %v45
    %73 = vmatprep.subr.mxu0 0.0
    %74 = vmatpush1.msra.mxu0 %v46
    %75 = vmatprep.subr.mxu0 0.0
    %76 = vmatpush1.msra.mxu0 %v47
    %77 = vmatprep.subr.mxu0 0.0
    %78 = vmatpush1.msra.mxu0 %v48
    %79 = vmatprep.subr.mxu0 0.0
    %80 = vmatpush1.msra.mxu0 %v49
    %81 = vmatprep.subr.mxu0 0.0
    %82 = vmatpush1.msra.mxu0 %v50
    %83 = vmatprep.subr.mxu0 0.0
    %84 = vmatpush1.msra.mxu0 %v51
    %85 = vmatprep.subr.mxu0 0.0
    %86 = vmatpush1.msra.mxu0 %v52
    %87 = vmatprep.subr.mxu0 0.0
    %88 = vmatpush1.msra.mxu0 %v53
    %89 = vmatprep.subr.mxu0 0.0
    %90 = vmatpush1.msra.mxu0 %v54
    %91 = vmatprep.subr.mxu0 0.0
    %92 = vmatpush1.msra.mxu0 %v55
    %93 = vmatprep.subr.mxu0 0.0
    %94 = vmatpush1.msra.mxu0 %v56
    %95 = vmatprep.subr.mxu0 0.0
    %96 = vmatpush1.msra.mxu0 %v57
    %97 = vmatprep.subr.mxu0 0.0
    %98 = vmatpush1.msra.mxu0 0.0
    %99 = vmatprep.subr.mxu0 0.0
    %100 = vmatpush1.msra.mxu0 0.0
    %101 = vmatprep.subr.mxu0 0.0
    %102 = vmatpush1.msra.mxu0 0.0
    %103 = vmatprep.subr.mxu0 0.0
    %104 = vmatpush1.msra.mxu0 0.0
    %105 = vmatprep.subr.mxu0 0.0
    %106 = vmatpush1.msra.mxu0 0.0
    %107 = vmatprep.subr.mxu0 0.0
    %108 = vmatpush1.msra.mxu0 0.0
    %109 = vmatprep.subr.mxu0 0.0
    %110 = vmatpush1.msra.mxu0 0.0
    %111 = vmatprep.subr.mxu0 0.0
    %112 = vmatpush1.msra.mxu0 0.0
    %113 = vmatprep.subr.mxu0 0.0
    %114 = vmatpush1.msra.mxu0 0.0
    %115 = vmatprep.subr.mxu0 0.0
    %116 = vmatpush1.msra.mxu0 0.0
    %117 = vmatprep.subr.mxu0 0.0
    %118 = vmatpush1.msra.mxu0 0.0
    %119 = vmatprep.subr.mxu0 0.0
    %120 = vmatpush1.msra.mxu0 0.0
    %121 = vmatprep.subr.mxu0 0.0
    %122 = vmatpush1.msra.mxu0 0.0
    %123 = vmatprep.subr.mxu0 0.0
    %124 = vmatpush1.msra.mxu0 0.0
    %125 = vmatprep.subr.mxu0 0.0
    %126 = vmatpush1.msra.mxu0 0.0
    %127 = vmatprep.subr.mxu0 0.0
    %128 = vmatpush1.msra.mxu0 0.0
    %129 = vmatprep.mubr.f32.mxu0 0.0
    %130 = vmatmul.mubr.f32.gmra.mrb[0].mxu0 %v41
    %v131 = vpop.f32.mrb[0].mxu0
    %v132 = vadd.f32 %v63, %v131
    %v133 = vpop.f32.mrb[0].mxu0
    %134 = vdwg.mxu0
    %v135 = vtanh.pop %v132
    %136 = vst [vmem:[#allocation7] sm:$0x3] %v135
    // Predicated region
    $region22: #{tpu_custom_call.1} parent=1 // pred_check
      _
    $region23: #{tpu_custom_call.1} parent=1 // pred_check_branch
      %138 = sbr.rel (0) target = $region25
    $region24: #{tpu_custom_call.1} parent=1 // pred_region
      %s140 = ssub.s32 32, 32
      %141 = vsyncadd [#allocation4], %s140
      %s143 = sshll.u32 [#allocation7], 4
      %s144 = int_to_ptr.vmem [resolvable:$true] %s143
      %146 = dma.vmem_to_hbm [thread:$0]  %s144, 32, %s3, [#allocation4]
    $region25: #{tpu_custom_call.1} parent=1 // pred_fallthru
      _
    // Predicated region
    $region26: #{tpu_custom_call.1} parent=1 // pred_check
      _
    $region27: #{tpu_custom_call.1} parent=1 // pred_check_branch
      %148 = sbr.rel (0) target = $region29
    $region28: #{tpu_custom_call.1} parent=1 // pred_region
      %149 = dma.done [#allocation4], 32
    $region29: #{tpu_custom_call.1} parent=1 // pred_fallthru
      _
    %150 = vsyncpa [#allocation3], 1
    %151 = vsyncpa [#allocation6], 1
    %152 = vsyncpa [#allocation4], 1

</llo_original>
